<compile_context>
chip_gen: v6e
topology: v6e:2x2x1
jax: 0.10.0
libtpu: 0.0.40
codegen_flags: <defaults>
</compile_context>

<pallas_src>
import jax
import jax.numpy as jnp
import numpy as np
from jax.experimental import pallas as pl
from jax.experimental.pallas import tpu as pltpu


def _round_up(x, m):
    return ((x + m - 1) // m) * m


def _agg_kernel(feats_ref, offs_ref, lens_ref, w_ref, b_ref, o_ref, acc_ref):
    # feats_ref: [TT, F]   float32  (T-tile of report features)
    # offs_ref:  [TB, 1]   int32    (segment start offsets for this B-tile)
    # lens_ref:  [TB, 1]   int32    (segment lengths for this B-tile)
    # w_ref:     [F, O_pad] float32
    # b_ref:     [1, O_pad] float32
    # o_ref:     [TB, O_pad] float32
    # acc_ref:   [TB, F]   float32 scratch (segment means, accumulated over T tiles)
    ti = pl.program_id(1)
    nt = pl.num_programs(1)
    TT = feats_ref.shape[0]
    TB = offs_ref.shape[0]

    @pl.when(ti == 0)
    def _init():
        acc_ref[...] = jnp.zeros_like(acc_ref)

    # Global report indices covered by this T tile.
    t0 = ti * TT
    col = jax.lax.broadcasted_iota(jnp.int32, (TB, TT), 1) + t0  # [TB, TT]
    off = offs_ref[...]                                          # [TB, 1]
    ln = lens_ref[...]                                           # [TB, 1]
    inside = (col >= off) & (col < off + ln)

    # Fold the mean into the mask: membership * 1/len.  Reciprocal goes to the EUP
    # (free slot); clamp len>=1 so zero-length / padded rows never produce inf
    # (their mask rows are all-zero anyway).
    inv_len = pl.reciprocal(jnp.maximum(ln, 1).astype(jnp.float32), approx=True)
    mask = inside.astype(jnp.float32) * inv_len                  # [TB, TT]

    # Partial segment-mean via MXU matmul: [TB,TT] @ [TT,F] -> [TB,F]
    acc_ref[...] += jnp.dot(mask, feats_ref[...], preferred_element_type=jnp.float32)

    @pl.when(ti == nt - 1)
    def _finalize():
        # fc + relu on the accumulated means: [TB,F] @ [F,O_pad] + [1,O_pad]
        out = jnp.dot(acc_ref[...], w_ref[...],
                      preferred_element_type=jnp.float32) + b_ref[...]
        o_ref[...] = jnp.maximum(out, 0.0)


def aggregation_cell(report_features, lengths, weight, bias, *,
                     t_tile=1024, b_tile=128):
    """
    report_features: [total_reports, 40] float32
    lengths:         [batch] int32  (contiguous segments, order = cumsum(lengths))
    weight:          [40, output_dim] float32  (W^T relative to PyTorch Linear)
    bias:            [output_dim] float32
    returns:         [batch, output_dim] float32
    """
    T, F = report_features.shape
    B = lengths.shape[0]
    O = weight.shape[1]

    # Tile sizes (sublane/lane aligned).
    TB = min(b_tile, _round_up(B, 8))
    B_pad = _round_up(B, TB)
    TT = min(t_tile, _round_up(T, 8))
    T_pad = _round_up(T, TT)
    O_pad = _round_up(O, 128)  # lane-dense output stores

    feats = jnp.pad(report_features.astype(jnp.float32), ((0, T_pad - T), (0, 0)))

    lengths_i = lengths.astype(jnp.int32)
    offsets = jnp.concatenate([jnp.zeros((1,), jnp.int32),
                               jnp.cumsum(lengths_i)[:-1]])
    offsets = jnp.pad(offsets, (0, B_pad - B)).reshape(B_pad, 1)
    lens2d = jnp.pad(lengths_i, (0, B_pad - B)).reshape(B_pad, 1)

    w_pad = jnp.pad(weight.astype(jnp.float32), ((0, 0), (0, O_pad - O)))
    b_pad = jnp.pad(bias.astype(jnp.float32), (0, O_pad - O)).reshape(1, O_pad)

    grid = (B_pad // TB, T_pad // TT)

    out = pl.pallas_call(
        _agg_kernel,
        out_shape=jax.ShapeDtypeStruct((B_pad, O_pad), jnp.float32),
        grid_spec=pltpu.PrefetchScalarGridSpec(
            num_scalar_prefetch=0,
            grid=grid,
            in_specs=[
                pl.BlockSpec((TT, F), lambda bi, ti: (ti, 0)),    # features (T-tiled)
                pl.BlockSpec((TB, 1), lambda bi, ti: (bi, 0)),    # segment offsets
                pl.BlockSpec((TB, 1), lambda bi, ti: (bi, 0)),    # segment lengths
                pl.BlockSpec((F, O_pad), lambda bi, ti: (0, 0)),  # fc weight (resident)
                pl.BlockSpec((1, O_pad), lambda bi, ti: (0, 0)),  # fc bias (resident)
            ],
            out_specs=pl.BlockSpec((TB, O_pad), lambda bi, ti: (bi, 0)),
            scratch_shapes=[pltpu.VMEM((TB, F), jnp.float32)],
        ),
        compiler_params=pltpu.CompilerParams(
            dimension_semantics=("parallel", "arbitrary"),
            vmem_limit_bytes=32 * 1024 * 1024,
        ),
    )(feats, offsets, lens2d, w_pad, b_pad)

    return out[:B, :O]


def _reference(report_features, lengths, weight, bias):
    """Pure-JAX reference mirroring the PyTorch forward (eval mode)."""
    offs = np.concatenate([[0], np.cumsum(np.asarray(lengths))[:-1]])
    pooled = []
    for o, l in zip(offs, np.asarray(lengths)):
        seg = report_features[o:o + l]
        pooled.append(seg.sum(axis=0) / jnp.asarray(l, report_features.dtype))
    pooled = jnp.stack(pooled, axis=0)
    return jax.nn.relu(pooled @ weight + bias)


if __name__ == "__main__":
    FEAT_DIM = 40     # in_features of the fc layer
    OUTPUT_DIM = 20   # output_dim
    BATCH = 2
    lengths = jnp.array([3, 5], dtype=jnp.int32)   # total_reports = 8
    total_reports = int(np.sum(np.asarray(lengths)))

    key = jax.random.PRNGKey(0)
    k_feat, k_w, k_b = jax.random.split(key, 3)
    report_features = jax.random.normal(k_feat, (total_reports, FEAT_DIM), jnp.float32)
    # Deterministic parameter init (nn.Linear shapes: weight [20,40], bias [20]);
    # kernel uses the [in, out] transpose.
    weight = (jax.random.normal(k_w, (FEAT_DIM, OUTPUT_DIM), jnp.float32)
              * (1.0 / np.sqrt(FEAT_DIM)))
    bias = jax.random.normal(k_b, (OUTPUT_DIM,), jnp.float32) * 0.1

    out = aggregation_cell(report_features, lengths, weight, bias)
    out = jax.block_until_ready(out)

    ref = _reference(report_features, lengths, weight, bias)
    # Tolerance accommodates the EUP approximate reciprocal (~1e-4 relative error)
    # used for the folded 1/len mean scaling.
    np.testing.assert_allclose(np.asarray(out), np.asarray(ref), rtol=1e-2, atol=1e-2)

    print("KERNEL_OK")
</pallas_src>

<mosaic_0001>
module attributes {stable_mosaic.version = 11 : i64} {
  func.func @_agg_kernel(%arg0: i32, %arg1: i32, %arg2: memref<8x40xf32, #tpu.memory_space<vmem>>, %arg3: memref<8x1xi32, #tpu.memory_space<vmem>>, %arg4: memref<8x1xi32, #tpu.memory_space<vmem>>, %arg5: memref<40x128xf32, #tpu.memory_space<vmem>>, %arg6: memref<1x128xf32, #tpu.memory_space<vmem>>, %arg7: memref<8x128xf32, #tpu.memory_space<vmem>>, %arg8: memref<8x40xf32, #tpu.memory_space<vmem>>) attributes {dimension_semantics = [#tpu.dimension_semantics<parallel>, #tpu.dimension_semantics<arbitrary>], iteration_bounds = array<i64: 1, 1>, scalar_prefetch = 0 : i64, scratch_operands = 1 : i64, tpu.core_type = #tpu.core_type<tc>, window_params = [{transform_indices = @transform_0, window_bounds = array<i64: 8, 40>}, {transform_indices = @transform_1, window_bounds = array<i64: 8, 1>}, {transform_indices = @transform_2, window_bounds = array<i64: 8, 1>}, {pipeline_mode = #tpu.pipeline_mode<synchronous>, transform_indices = @transform_3, window_bounds = array<i64: 40, 128>}, {pipeline_mode = #tpu.pipeline_mode<synchronous>, transform_indices = @transform_4, window_bounds = array<i64: 1, 128>}, {transform_indices = @transform_5, window_bounds = array<i64: 8, 128>}]} {
    %c0_i32 = arith.constant 0 : i32
    %0 = arith.cmpi eq, %arg1, %c0_i32 : i32
    %1 = arith.extui %0 : i1 to i32
    %c0_i32_0 = arith.constant 0 : i32
    %2 = arith.cmpi ne, %1, %c0_i32_0 : i32
    scf.if %2 {
      %cst_12 = arith.constant 0.000000e+00 : f32
      %31 = vector.broadcast %cst_12 : f32 to vector<8x40xf32>
      %c0_13 = arith.constant 0 : index
      %c0_14 = arith.constant 0 : index
      %32 = vector.load %arg8[%c0_13, %c0_14] : memref<8x40xf32, #tpu.memory_space<vmem>>, vector<8x40xf32>
      tpu.vector_store %arg8[%c0_13, %c0_14], %31 {strides = array<i32>} : memref<8x40xf32, #tpu.memory_space<vmem>>, vector<8x40xf32>,
    } else {
    }
    %c8_i32 = arith.constant 8 : i32
    %3 = arith.muli %arg1, %c8_i32 : i32
    %4 = tpu.iota {dimensions = array<i32: 1>} : vector<8x8xi32>
    %5 = vector.broadcast %3 : i32 to vector<8x8xi32>
    %6 = arith.addi %4, %5 : vector<8x8xi32>
    %c0 = arith.constant 0 : index
    %c0_1 = arith.constant 0 : index
    %7 = vector.load %arg3[%c0, %c0_1] : memref<8x1xi32, #tpu.memory_space<vmem>>, vector<8x1xi32>
    %c0_2 = arith.constant 0 : index
    %c0_3 = arith.constant 0 : index
    %8 = vector.load %arg4[%c0_2, %c0_3] : memref<8x1xi32, #tpu.memory_space<vmem>>, vector<8x1xi32>
    %9 = vector.broadcast %7 : vector<8x1xi32> to vector<8x8xi32>
    %10 = arith.cmpi sge, %6, %9 : vector<8x8xi32>
    %11 = arith.addi %7, %8 : vector<8x1xi32>
    %12 = vector.broadcast %11 : vector<8x1xi32> to vector<8x8xi32>
    %13 = arith.cmpi slt, %6, %12 : vector<8x8xi32>
    %14 = arith.andi %10, %13 : vector<8x8xi1>
    %c1_i32 = arith.constant 1 : i32
    %15 = vector.broadcast %c1_i32 : i32 to vector<8x1xi32>
    %16 = arith.maxsi %8, %15 : vector<8x1xi32>
    %17 = arith.sitofp %16 : vector<8x1xi32> to vector<8x1xf32>
    %18 = tpu.reciprocal %17 {approx = true} : vector<8x1xf32> -> vector<8x1xf32>
    %19 = arith.extui %14 : vector<8x8xi1> to vector<8x8xi32>
    %20 = arith.sitofp %19 : vector<8x8xi32> to vector<8x8xf32>
    %21 = vector.broadcast %18 : vector<8x1xf32> to vector<8x8xf32>
    %22 = arith.mulf %20, %21 : vector<8x8xf32>
    %c0_4 = arith.constant 0 : index
    %c0_5 = arith.constant 0 : index
    %23 = vector.load %arg8[%c0_4, %c0_5] : memref<8x40xf32, #tpu.memory_space<vmem>>, vector<8x40xf32>
    %c0_6 = arith.constant 0 : index
    %c0_7 = arith.constant 0 : index
    %24 = vector.load %arg2[%c0_6, %c0_7] : memref<8x40xf32, #tpu.memory_space<vmem>>, vector<8x40xf32>
    %cst = arith.constant dense<0.000000e+00> : vector<8x40xf32>
    %25 = tpu.matmul %22, %24, %cst {dimension_numbers = #tpu.dot_dimension_numbers<[1], [0], [0], [1], [0, 0, 1, 1], [], []>} : vector<8x8xf32>, vector<8x40xf32>, vector<8x40xf32> -> vector<8x40xf32>
    %26 = arith.addf %23, %25 : vector<8x40xf32>
    %c0_8 = arith.constant 0 : index
    %c0_9 = arith.constant 0 : index
    %27 = vector.load %arg8[%c0_8, %c0_9] : memref<8x40xf32, #tpu.memory_space<vmem>>, vector<8x40xf32>
    tpu.vector_store %arg8[%c0_8, %c0_9], %26 {strides = array<i32>} : memref<8x40xf32, #tpu.memory_space<vmem>>, vector<8x40xf32>,
    %c0_i32_10 = arith.constant 0 : i32
    %28 = arith.cmpi eq, %arg1, %c0_i32_10 : i32
    %29 = arith.extui %28 : i1 to i32
    %c0_i32_11 = arith.constant 0 : i32
    %30 = arith.cmpi ne, %29, %c0_i32_11 : i32
    scf.if %30 {
      %c0_12 = arith.constant 0 : index
      %c0_13 = arith.constant 0 : index
      %31 = vector.load %arg8[%c0_12, %c0_13] : memref<8x40xf32, #tpu.memory_space<vmem>>, vector<8x40xf32>
      %c0_14 = arith.constant 0 : index
      %c0_15 = arith.constant 0 : index
      %32 = vector.load %arg5[%c0_14, %c0_15] : memref<40x128xf32, #tpu.memory_space<vmem>>, vector<40x128xf32>
      %cst_16 = arith.constant dense<0.000000e+00> : vector<8x128xf32>
      %33 = tpu.matmul %31, %32, %cst_16 {dimension_numbers = #tpu.dot_dimension_numbers<[1], [0], [0], [1], [0, 0, 1, 1], [], []>} : vector<8x40xf32>, vector<40x128xf32>, vector<8x128xf32> -> vector<8x128xf32>
      %c0_17 = arith.constant 0 : index
      %c0_18 = arith.constant 0 : index
      %34 = vector.load %arg6[%c0_17, %c0_18] : memref<1x128xf32, #tpu.memory_space<vmem>>, vector<1x128xf32>
      %35 = vector.broadcast %34 : vector<1x128xf32> to vector<8x128xf32>
      %36 = arith.addf %33, %35 : vector<8x128xf32>
      %cst_19 = arith.constant 0.000000e+00 : f32
      %37 = vector.broadcast %cst_19 : f32 to vector<8x128xf32>
      %38 = arith.maximumf %36, %37 : vector<8x128xf32>
      %c0_20 = arith.constant 0 : index
      %c0_21 = arith.constant 0 : index
      %39 = vector.load %arg7[%c0_20, %c0_21] : memref<8x128xf32, #tpu.memory_space<vmem>>, vector<8x128xf32>
      tpu.vector_store %arg7[%c0_20, %c0_21], %38 {strides = array<i32>} : memref<8x128xf32, #tpu.memory_space<vmem>>, vector<8x128xf32>,
    } else {
    }
    return
  }
  func.func @transform_0(%arg0: i32, %arg1: i32) -> (i32, i32) {
    %c0_i32 = arith.constant 0 : i32
    %c0_i32_0 = arith.constant 0 : i32
    return %arg1, %c0_i32 : i32, i32
  }
  func.func @transform_1(%arg0: i32, %arg1: i32) -> (i32, i32) {
    %c0_i32 = arith.constant 0 : i32
    %c0_i32_0 = arith.constant 0 : i32
    return %arg0, %c0_i32 : i32, i32
  }
  func.func @transform_2(%arg0: i32, %arg1: i32) -> (i32, i32) {
    %c0_i32 = arith.constant 0 : i32
    %c0_i32_0 = arith.constant 0 : i32
    return %arg0, %c0_i32 : i32, i32
  }
  func.func @transform_3(%arg0: i32, %arg1: i32) -> (i32, i32) {
    %c0_i32 = arith.constant 0 : i32
    %c0_i32_0 = arith.constant 0 : i32
    %c0_i32_1 = arith.constant 0 : i32
    return %c0_i32, %c0_i32_0 : i32, i32
  }
  func.func @transform_4(%arg0: i32, %arg1: i32) -> (i32, i32) {
    %c0_i32 = arith.constant 0 : i32
    %c0_i32_0 = arith.constant 0 : i32
    %c0_i32_1 = arith.constant 0 : i32
    return %c0_i32, %c0_i32_0 : i32, i32
  }
  func.func @transform_5(%arg0: i32, %arg1: i32) -> (i32, i32) {
    %c0_i32 = arith.constant 0 : i32
    %c0_i32_0 = arith.constant 0 : i32
    return %arg0, %c0_i32 : i32, i32
  }
}

</mosaic_0001>

<llo_original>
// kernel: tpu_custom_call.1
$region0: #{tpu_custom_call.1}
  #allocation0 [shape = 'u32[]', space=smem, size = 0x4, offset = 0x4, fixed_abs, tag = 'smem constant byte address 0x4 - core index']
  #allocation1 [shape = 'u32[144,128]{1,0:T(1,128)}', space=vmem, size = 0x12000, scoped, tag = 'internal scratch']
  #allocation2 [shape = 'f32[8,40]{1,0:T(8,128)}', space=vmem, size = 0x1000, scoped, tag = 'scratch operand']
  %s0 = inlined_call_operand.vmem [shape: f32[8,40], index: 0, kind: input, shape index: {}]
  %s1 = inlined_call_operand.vmem [shape: s32[8,1], index: 1, kind: input, shape index: {}]
  %s2 = inlined_call_operand.vmem [shape: s32[8,1], index: 2, kind: input, shape index: {}]
  %s3 = inlined_call_operand.hbm [shape: f32[40,128], index: 3, kind: input, shape index: {}]
  %s4 = inlined_call_operand.vmem [shape: f32[1,128], index: 4, kind: input, shape index: {}]
  %s5 = inlined_call_operand.hbm [shape: f32[8,128], index: 5, kind: output, shape index: {}]
  %s6 = sld [smem:[#allocation0]]
  $region42: #{tpu_custom_call.1} parent=0
    _
  %s8 = ssub.s32 1, %s6
  %s9 = scalar_select 0, %s8, %s6
  $region1: #{tpu_custom_call.1} parent=0
    #allocation3 [shape = 'u8[20480]{0}', space=vmem, size = 0x5000, scoped, tag = 'input window, operand 3, single buffered']
    #allocation4 [shape = 's32[1]{0}', space=sflag, size = 0x4, scoped, tag = 'scoped memory for tpu_custom_call.1']
    #allocation5 [shape = 's32[1]{0}', space=sflag, size = 0x4, scoped, tag = 'scoped memory for tpu_custom_call.1']
    #allocation6 [shape = 'u8[4096]{0}', space=vmem, size = 0x1000, scoped, tag = 'output window, operand 0, single buffered']
    %10 = vsyncpa [#allocation4], 0
    %11 = vsyncpa [#allocation5], 0
    // Predicated region
    $region2: #{tpu_custom_call.1} parent=1 // pred_check
      _
    $region3: #{tpu_custom_call.1} parent=1 // pred_check_branch
      %13 = sbr.rel (0) target = $region5
    $region4: #{tpu_custom_call.1} parent=1 // pred_region
      _
    $region5: #{tpu_custom_call.1} parent=1 // pred_fallthru
      _
    // Predicated region
    $region6: #{tpu_custom_call.1} parent=1 // pred_check
      _
    $region7: #{tpu_custom_call.1} parent=1 // pred_check_branch
      %15 = sbr.rel (0) target = $region9
    $region8: #{tpu_custom_call.1} parent=1 // pred_region
      _
    $region9: #{tpu_custom_call.1} parent=1 // pred_fallthru
      _
    // Predicated region
    $region10: #{tpu_custom_call.1} parent=1 // pred_check
      _
    $region11: #{tpu_custom_call.1} parent=1 // pred_check_branch
      %17 = sbr.rel (0) target = $region13
    $region12: #{tpu_custom_call.1} parent=1 // pred_region
      _
    $region13: #{tpu_custom_call.1} parent=1 // pred_fallthru
      _
    // Predicated region
    $region14: #{tpu_custom_call.1} parent=1 // pred_check
      _
    $region15: #{tpu_custom_call.1} parent=1 // pred_check_branch
      %19 = sbr.rel (0) target = $region17
    $region16: #{tpu_custom_call.1} parent=1 // pred_region
      %s21 = ssub.s32 640, 640
      %22 = vsyncadd [#allocation4], %s21
      %s23 = sshll.u32 [#allocation3], 4
      %s24 = int_to_ptr.vmem [resolvable:$true] %s23
      %29 = dma.hbm_to_vmem [thread:$0]  %s3, 640, %s24, [#allocation4], 128, 128, 8
    $region17: #{tpu_custom_call.1} parent=1 // pred_fallthru
      _
    // Predicated region
    $region18: #{tpu_custom_call.1} parent=1 // pred_check
      _
    $region19: #{tpu_custom_call.1} parent=1 // pred_check_branch
      %31 = sbr.rel (0) target = $region21
    $region20: #{tpu_custom_call.1} parent=1 // pred_region
      _
    $region21: #{tpu_custom_call.1} parent=1 // pred_fallthru
      _
    // Predicated region
    $region22: #{tpu_custom_call.1} parent=1 // pred_check
      _
    $region23: #{tpu_custom_call.1} parent=1 // pred_check_branch
      %33 = sbr.rel (0) target = $region25
    $region24: #{tpu_custom_call.1} parent=1 // pred_region
      %34 = dma.done [#allocation4], 640
    $region25: #{tpu_custom_call.1} parent=1 // pred_fallthru
      _
    %p35 = scmp.eq.s32.totalorder 0, 0
    // Predicated region
    $region26: #{tpu_custom_call.1} parent=1 // pred_check
      %p36 = pneg %p35
    $region27: #{tpu_custom_call.1} parent=1 // pred_check_branch
      %38 = sbr.rel (%p36) target = $region29
    $region28: #{tpu_custom_call.1} parent=1 // pred_region
      %vm39 = vcmask 326656
      %40 = vst.msk [vmem:[#allocation2] sm:$0xff] %vm39, 0.0
    $region29: #{tpu_custom_call.1} parent=1 // pred_fallthru
      _
    %s41 = smul.u32 0, 8
    %v42 = vlaneseq
    %v43 = vand.u32 %v42, 127
    %v44 = vstv %s41
    %v45 = vadd.s32 %v43, %v44
    %v46 = vld [vmem:[%s1] sm:$0xff]
    %v47 = vld [vmem:[%s2] sm:$0xff]
    %48 = vset.pattern.permute.xlu0 0
    %49 = vperm.xlu0 %48, %v46
    %v50 = vpop.permute.xlu0 %49
    %vm51 = vcmp.ge.s32.totalorder %v45, %v50
    %v52 = vadd.s32 %v46, %v47
    %53 = vset.pattern.permute.xlu0 0
    %54 = vperm.xlu0 %53, %v52
    %v55 = vpop.permute.xlu0 %54
    %vm56 = vcmp.lt.s32.totalorder %v45, %v55
    %vm57 = vmand %vm51, %vm56
    %vm58 = vcmp.gt.s32.totalorder %v47, 1
    %v59 = vsel %vm58, %v47, 1
    %v60 = vcvt.s32.f32 %v59
    %v61 = vrcp.pop %v60
    %v62 = vsel %vm57, 1, 0
    %v63 = vcvt.s32.f32 %v62
    %65 = vset.pattern.permute.xlu0 0
    %66 = vperm.xlu0 %65, %v61
    %v67 = vpop.permute.xlu0 %66
    %v69 = vmul.f32 %v63, %v67
    %v70 = vld [vmem:[#allocation2] sm:$0xff]
    %v71 = vld [vmem:[%s0] sm:$0xff]
    %vm72 = vcmask 64512
    %v74 = vsel %vm72, %v69, 0
    %76 = vmatprep.subr.mxu0 0.0
    %77 = vmatpush1.msra.mxu0 0.0
    %78 = vmatprep.subr.mxu0 0.0
    %79 = vmatpush1.msra.mxu0 0.0
    %80 = vmatprep.subr.mxu0 0.0
    %81 = vmatpush1.msra.mxu0 0.0
    %82 = vmatprep.subr.mxu0 0.0
    %83 = vmatpush1.msra.mxu0 0.0
    %84 = vmatprep.subr.mxu0 0.0
    %85 = vmatpush1.msra.mxu0 0.0
    %86 = vmatprep.subr.mxu0 0.0
    %87 = vmatpush1.msra.mxu0 0.0
    %88 = vmatprep.subr.mxu0 0.0
    %89 = vmatpush1.msra.mxu0 0.0
    %90 = vmatprep.subr.mxu0 0.0
    %91 = vmatpush1.msra.mxu0 0.0
    %92 = vmatprep.subr.mxu0 0.0
    %93 = vmatpush1.msra.mxu0 0.0
    %94 = vmatprep.subr.mxu0 0.0
    %95 = vmatpush1.msra.mxu0 0.0
    %96 = vmatprep.subr.mxu0 0.0
    %97 = vmatpush1.msra.mxu0 0.0
    %98 = vmatprep.subr.mxu0 0.0
    %99 = vmatpush1.msra.mxu0 0.0
    %100 = vmatprep.subr.mxu0 0.0
    %101 = vmatpush1.msra.mxu0 0.0
    %102 = vmatprep.subr.mxu0 0.0
    %103 = vmatpush1.msra.mxu0 0.0
    %104 = vmatprep.subr.mxu0 0.0
    %105 = vmatpush1.msra.mxu0 0.0
    %106 = vmatprep.subr.mxu0 0.0
    %107 = vmatpush1.msra.mxu0 %v71
    %108 = vmatprep.subr.mxu0 0.0
    %109 = vmatpush2.msra.mxu0 0.0
    %110 = vmatprep.subr.mxu0 0.0
    %111 = vmatpush2.msra.mxu0 0.0
    %112 = vmatprep.subr.mxu0 0.0
    %113 = vmatpush2.msra.mxu0 0.0
    %114 = vmatprep.subr.mxu0 0.0
    %115 = vmatpush2.msra.mxu0 0.0
    %116 = vmatprep.subr.mxu0 0.0
    %117 = vmatpush2.msra.mxu0 0.0
    %118 = vmatprep.subr.mxu0 0.0
    %119 = vmatpush2.msra.mxu0 0.0
    %120 = vmatprep.subr.mxu0 0.0
    %121 = vmatpush2.msra.mxu0 0.0
    %122 = vmatprep.subr.mxu0 0.0
    %123 = vmatpush2.msra.mxu0 0.0
    %124 = vmatprep.subr.mxu0 0.0
    %125 = vmatpush2.msra.mxu0 0.0
    %126 = vmatprep.subr.mxu0 0.0
    %127 = vmatpush2.msra.mxu0 0.0
    %128 = vmatprep.subr.mxu0 0.0
    %129 = vmatpush2.msra.mxu0 0.0
    %130 = vmatprep.subr.mxu0 0.0
    %131 = vmatpush2.msra.mxu0 0.0
    %132 = vmatprep.subr.mxu0 0.0
    %133 = vmatpush2.msra.mxu0 0.0
    %134 = vmatprep.subr.mxu0 0.0
    %135 = vmatpush2.msra.mxu0 0.0
    %136 = vmatprep.subr.mxu0 0.0
    %137 = vmatpush2.msra.mxu0 0.0
    %138 = vmatprep.subr.mxu0 0.0
    %139 = vmatpush2.msra.mxu0 0.0
    %140 = vmatprep.mubr.f32.mxu0 0.0
    %141 = vmatmul.mubr.f32.gmra.mxu0 %v74
    %v142 = vpop.f32.mrf.mxu0
    %v143 = vadd.f32 0.0, %v142
    %v144 = vpop.f32.mrf.mxu0
    %145 = vdwg.mxu0
    %v146 = vadd.f32 %v70, %v143
    %vm147 = vcmask 326656
    %148 = vst.msk [vmem:[#allocation2] sm:$0xff] %vm147, %v146
    // Predicated region
    $region30: #{tpu_custom_call.1} parent=1 // pred_check
      %p149 = pneg %p35
    $region31: #{tpu_custom_call.1} parent=1 // pred_check_branch
      %151 = sbr.rel (%p149) target = $region33
    $region32: #{tpu_custom_call.1} parent=1 // pred_region
      %v152 = vld [vmem:[#allocation2] sm:$0xff]
      %v153 = vld [vmem:[#allocation3] sm:$0xff]
      %v154 = vld [vmem:[#allocation3 + $0x8] sm:$0xff]
      %v155 = vld [vmem:[#allocation3 + $0x10] sm:$0xff]
      %v156 = vld [vmem:[#allocation3 + $0x18] sm:$0xff]
      %v157 = vld [vmem:[#allocation3 + $0x20] sm:$0xff]
      %v158 = vld [vmem:[%s4] sm:$0x1]
      %v160 = vlaneseq
      %v161 = vshrl.u32 %v160, 7
      %v162 = vsub.s32 0, %v161
      %v163 = vrot.slane %v158, %v162
      %v166 = vsel %vm147, %v152, 0
      %168 = vmatprep.subr.mxu0 0.0
      %169 = vmatpush1.msra.mxu0 0.0
      %170 = vmatprep.subr.mxu0 0.0
      %171 = vmatpush1.msra.mxu0 0.0
      %172 = vmatprep.subr.mxu0 0.0
      %173 = vmatpush1.msra.mxu0 0.0
      %174 = vmatprep.subr.mxu0 0.0
      %175 = vmatpush1.msra.mxu0 0.0
      %176 = vmatprep.subr.mxu0 0.0
      %177 = vmatpush1.msra.mxu0 0.0
      %178 = vmatprep.subr.mxu0 0.0
      %179 = vmatpush1.msra.mxu0 0.0
      %180 = vmatprep.subr.mxu0 0.0
      %181 = vmatpush1.msra.mxu0 0.0
      %182 = vmatprep.subr.mxu0 0.0
      %183 = vmatpush1.msra.mxu0 0.0
      %184 = vmatprep.subr.mxu0 0.0
      %185 = vmatpush1.msra.mxu0 0.0
      %186 = vmatprep.subr.mxu0 0.0
      %187 = vmatpush1.msra.mxu0 0.0
      %188 = vmatprep.subr.mxu0 0.0
      %189 = vmatpush1.msra.mxu0 0.0
      %190 = vmatprep.subr.mxu0 0.0
      %191 = vmatpush1.msra.mxu0 %v157
      %192 = vmatprep.subr.mxu0 0.0
      %193 = vmatpush1.msra.mxu0 %v156
      %194 = vmatprep.subr.mxu0 0.0
      %195 = vmatpush1.msra.mxu0 %v155
      %196 = vmatprep.subr.mxu0 0.0
      %197 = vmatpush1.msra.mxu0 %v154
      %198 = vmatprep.subr.mxu0 0.0
      %199 = vmatpush1.msra.mxu0 %v153
      %200 = vmatprep.subr.mxu0 0.0
      %201 = vmatpush2.msra.mxu0 0.0
      %202 = vmatprep.subr.mxu0 0.0
      %203 = vmatpush2.msra.mxu0 0.0
      %204 = vmatprep.subr.mxu0 0.0
      %205 = vmatpush2.msra.mxu0 0.0
      %206 = vmatprep.subr.mxu0 0.0
      %207 = vmatpush2.msra.mxu0 0.0
      %208 = vmatprep.subr.mxu0 0.0
      %209 = vmatpush2.msra.mxu0 0.0
      %210 = vmatprep.subr.mxu0 0.0
      %211 = vmatpush2.msra.mxu0 0.0
      %212 = vmatprep.subr.mxu0 0.0
      %213 = vmatpush2.msra.mxu0 0.0
      %214 = vmatprep.subr.mxu0 0.0
      %215 = vmatpush2.msra.mxu0 0.0
      %216 = vmatprep.subr.mxu0 0.0
      %217 = vmatpush2.msra.mxu0 0.0
      %218 = vmatprep.subr.mxu0 0.0
      %219 = vmatpush2.msra.mxu0 0.0
      %220 = vmatprep.subr.mxu0 0.0
      %221 = vmatpush2.msra.mxu0 0.0
      %222 = vmatprep.subr.mxu0 0.0
      %223 = vmatpush2.msra.mxu0 0.0
      %224 = vmatprep.subr.mxu0 0.0
      %225 = vmatpush2.msra.mxu0 0.0
      %226 = vmatprep.subr.mxu0 0.0
      %227 = vmatpush2.msra.mxu0 0.0
      %228 = vmatprep.subr.mxu0 0.0
      %229 = vmatpush2.msra.mxu0 0.0
      %230 = vmatprep.subr.mxu0 0.0
      %231 = vmatpush2.msra.mxu0 0.0
      %232 = vmatprep.mubr.f32.mxu0 0.0
      %233 = vmatmul.mubr.f32.gmra.mxu0 %v166
      %v234 = vpop.f32.mrf.mxu0
      %v235 = vadd.f32 %v163, %v234
      %v236 = vpop.f32.mrf.mxu0
      %237 = vdwg.mxu0
      %v238 = vmax.f32 %v235, 0.0
      %239 = vst [vmem:[#allocation6] sm:$0xff] %v238
    $region33: #{tpu_custom_call.1} parent=1 // pred_fallthru
      _
    // Predicated region
    $region34: #{tpu_custom_call.1} parent=1 // pred_check
      _
    $region35: #{tpu_custom_call.1} parent=1 // pred_check_branch
      %241 = sbr.rel (0) target = $region37
    $region36: #{tpu_custom_call.1} parent=1 // pred_region
      %s243 = ssub.s32 128, 128
      %244 = vsyncadd [#allocation5], %s243
      %s246 = sshll.u32 [#allocation6], 4
      %s247 = int_to_ptr.vmem [resolvable:$true] %s246
      %249 = dma.vmem_to_hbm [thread:$0]  %s247, 128, %s5, [#allocation5]
    $region37: #{tpu_custom_call.1} parent=1 // pred_fallthru
      _
    // Predicated region
    $region38: #{tpu_custom_call.1} parent=1 // pred_check
      _
    $region39: #{tpu_custom_call.1} parent=1 // pred_check_branch
      %251 = sbr.rel (0) target = $region41
    $region40: #{tpu_custom_call.1} parent=1 // pred_region
      %252 = dma.done [#allocation5], 128
    $region41: #{tpu_custom_call.1} parent=1 // pred_fallthru
      _
    %253 = vsyncpa [#allocation4], 1
    %254 = vsyncpa [#allocation5], 1

</llo_original>
